<compile_context>
chip_gen: v5e
topology: v5e:2x2
jax: 0.10.0
libtpu: 0.0.40
codegen_flags: <defaults>
</compile_context>

<pallas_src>
import functools

import jax
import jax.numpy as jnp
from jax.experimental import pallas as pl
from jax.experimental.pallas import tpu as pltpu

LN_EPS = 1e-5  # nn.LayerNorm default


def _round_up(n, m):
    return (n + m - 1) // m * m


def _hw_vmem_bytes():
    # Physical VMEM of the attached TPU; conservative fallback (v7x-sized).
    try:
        return int(pltpu.get_tpu_info().vmem_capacity_bytes)
    except Exception:
        return 64 << 20


def _layer_norm_f32(x_ref, gamma_ref, beta_ref, *, d_true):
    """LayerNorm over the last axis in f32, single fused reduction pass.

    Relies on any padded feature lanes of x / gamma / beta being zero-filled
    by the wrapper, so sums over the (tm, d_pad) tile are already exact and
    padded output lanes come out as exactly 0.
    """
    x = x_ref[...].astype(jnp.float32)                 # (TM, d_pad)
    inv_d = 1.0 / d_true
    sum_x = jnp.sum(x, axis=-1, keepdims=True)
    sum_xx = jnp.sum(x * x, axis=-1, keepdims=True)
    mean = sum_x * inv_d
    var = jnp.maximum(sum_xx * inv_d - mean * mean, 0.0)
    inv_std = jax.lax.rsqrt(var + LN_EPS)
    gamma = gamma_ref[...].astype(jnp.float32)
    beta = beta_ref[...].astype(jnp.float32)
    return (x - mean) * inv_std * gamma + beta


def _prenorm_fused_kernel(x_ref, gamma_ref, beta_ref, w_ref, bias_ref, o_ref,
                          *, d_true):
    # 1-D grid over row tiles; the whole weight is resident in VMEM (its
    # block index never changes, so it is DMA'd from HBM exactly once).
    y = _layer_norm_f32(x_ref, gamma_ref, beta_ref, d_true=d_true)
    y = y.astype(w_ref.dtype)                          # MXU-native dtype
    out = jnp.dot(y, w_ref[...], preferred_element_type=jnp.float32)
    out = out + bias_ref[...].astype(jnp.float32)
    o_ref[...] = out.astype(o_ref.dtype)


def _prenorm_ntiled_kernel(x_ref, gamma_ref, beta_ref, w_ref, bias_ref, o_ref,
                           y_ref, *, d_true):
    # Grid = (row tiles, output-column tiles).  LayerNorm of the current row
    # tile is computed once (j == 0) into the VMEM scratch `y_ref`, then
    # reused for every weight-column tile.
    @pl.when(pl.program_id(1) == 0)
    def _():
        y = _layer_norm_f32(x_ref, gamma_ref, beta_ref, d_true=d_true)
        y_ref[...] = y.astype(y_ref.dtype)

    out = jnp.dot(y_ref[...], w_ref[...], preferred_element_type=jnp.float32)
    out = out + bias_ref[...].astype(jnp.float32)
    o_ref[...] = out.astype(o_ref.dtype)


def _tile_footprint(tm, tn, d_pad, x_bytes, w_bytes, o_bytes, n_tiled):
    f = 2 * tm * d_pad * x_bytes        # x row tiles (double buffered)
    f += 2 * d_pad * tn * w_bytes       # W column tiles (double buffered)
    f += 2 * tm * tn * o_bytes          # output tiles (double buffered)
    f += 2 * tm * d_pad * 4             # f32 LN temporaries / spill headroom
    if n_tiled:
        f += tm * d_pad * w_bytes       # cached LN(x) scratch
    f += 8 * d_pad * 4                  # gamma / beta / bias vectors
    return f


@functools.partial(jax.jit, static_argnames=("cast_weight_to_bf16",))
def prenorm_linear(x, gamma, beta, w, b, *, cast_weight_to_bf16=False):
    """PreNorm(dim, fn=Linear(dim, dim)) forward. x: [B, S, D]."""
    B, S, D = x.shape
    rows = B * S
    d_pad = _round_up(D, 128)
    d_is_padded = d_pad != D

    if cast_weight_to_bf16 and w.dtype == jnp.float32:
        w = w.astype(jnp.bfloat16)

    x_bytes = jnp.dtype(x.dtype).itemsize
    w_bytes = jnp.dtype(w.dtype).itemsize
    o_bytes = x_bytes

    hw_vmem = _hw_vmem_bytes()
    budget = hw_vmem - (16 << 20)       # headroom for compiler scratch etc.

    # --- output-column tile: keep the whole W resident whenever it fits. ---
    if d_pad * d_pad * w_bytes <= hw_vmem // 4:
        tn = d_pad
    else:
        tn = min(512, d_pad)            # 256-wide MXU friendly
        while tn > 128 and _tile_footprint(16, tn, d_pad, x_bytes, w_bytes,
                                           o_bytes, True) > budget:
            tn //= 2
    n_tiled = tn < d_pad

    # --- row tile: as large as the VMEM budget allows (amortizes per-step
    # overhead and fills the MXU M dim), aligned to the sublane packing. ---
    row_align = 16 if (x.dtype == jnp.bfloat16 or w.dtype == jnp.bfloat16) else 8
    tm = min(512, _round_up(rows, row_align))
    while tm > row_align and _tile_footprint(tm, tn, d_pad, x_bytes, w_bytes,
                                             o_bytes, n_tiled) > budget:
        tm = max(row_align, _round_up(tm // 2, row_align))
    # v7x has 2 TensorCores: make sure the "parallel" row axis has >= 2 steps.
    if rows > row_align and pl.cdiv(rows, tm) < 2:
        tm = max(row_align, _round_up(pl.cdiv(rows, 2), row_align))

    footprint = _tile_footprint(tm, tn, d_pad, x_bytes, w_bytes, o_bytes,
                                n_tiled)
    vmem_limit = int(min(hw_vmem * 15 // 16,
                         max(32 << 20, footprint + (16 << 20))))

    # --- wrapper-side layout: rows are never padded (partial last row tile);
    # the feature dim is zero-padded only when D is not lane-aligned. ---
    x2 = x.reshape(rows, D)
    gamma2 = gamma.reshape(1, D)
    beta2 = beta.reshape(1, D)
    b2 = b.reshape(1, D)
    w2 = w
    if d_is_padded:
        padd = d_pad - D
        x2 = jnp.pad(x2, ((0, 0), (0, padd)))
        gamma2 = jnp.pad(gamma2, ((0, 0), (0, padd)))
        beta2 = jnp.pad(beta2, ((0, 0), (0, padd)))
        b2 = jnp.pad(b2, ((0, 0), (0, padd)))
        w2 = jnp.pad(w, ((0, padd), (0, padd)))

    if n_tiled:
        grid = (pl.cdiv(rows, tm), pl.cdiv(d_pad, tn))
        kernel = functools.partial(_prenorm_ntiled_kernel, d_true=D)
        in_specs = [
            pl.BlockSpec((tm, d_pad), lambda i, j: (i, 0)),    # x rows
            pl.BlockSpec((1, d_pad), lambda i, j: (0, 0)),     # gamma
            pl.BlockSpec((1, d_pad), lambda i, j: (0, 0)),     # beta
            pl.BlockSpec((d_pad, tn), lambda i, j: (0, j)),    # W column tile
            pl.BlockSpec((1, tn), lambda i, j: (0, j)),        # bias tile
        ]
        out_specs = pl.BlockSpec((tm, tn), lambda i, j: (i, j))
        scratch_shapes = [pltpu.VMEM((tm, d_pad), w.dtype)]    # cached LN(x)
        dims = ("parallel", "arbitrary")
    else:
        grid = (pl.cdiv(rows, tm),)
        kernel = functools.partial(_prenorm_fused_kernel, d_true=D)
        in_specs = [
            pl.BlockSpec((tm, d_pad), lambda i: (i, 0)),       # x rows
            pl.BlockSpec((1, d_pad), lambda i: (0, 0)),        # gamma
            pl.BlockSpec((1, d_pad), lambda i: (0, 0)),        # beta
            pl.BlockSpec((d_pad, d_pad), lambda i: (0, 0)),    # W (resident)
            pl.BlockSpec((1, d_pad), lambda i: (0, 0)),        # bias
        ]
        out_specs = pl.BlockSpec((tm, d_pad), lambda i: (i, 0))
        scratch_shapes = []
        dims = ("parallel",)

    out2 = pl.pallas_call(
        kernel,
        out_shape=jax.ShapeDtypeStruct((rows, d_pad), x.dtype),
        grid_spec=pltpu.PrefetchScalarGridSpec(
            num_scalar_prefetch=0,
            grid=grid,
            in_specs=in_specs,
            out_specs=out_specs,
            scratch_shapes=scratch_shapes,
        ),
        compiler_params=pltpu.CompilerParams(
            dimension_semantics=dims,
            vmem_limit_bytes=vmem_limit,
        ),
    )(x2, gamma2, beta2, w2, b2)

    if d_is_padded:
        out2 = out2[:, :D]
    return out2.reshape(B, S, D)


def _reference(x, gamma, beta, w, b):
    xf = x.astype(jnp.float32)
    mean = jnp.mean(xf, axis=-1, keepdims=True)
    var = jnp.mean((xf - mean) ** 2, axis=-1, keepdims=True)
    y = (xf - mean) / jnp.sqrt(var + LN_EPS) * gamma + beta
    return jnp.dot(y, w.astype(jnp.float32)) + b


if __name__ == "__main__":
    key = jax.random.PRNGKey(0)
    B, S, D = 2, 8, 32
    kx, kw, kbias = jax.random.split(key, 3)

    x = jax.random.normal(kx, (B, S, D), dtype=jnp.float32)
    # Deterministic params (LayerNorm: gamma=1, beta=0; Linear: small randn).
    gamma = jnp.ones((D,), dtype=jnp.float32)
    beta = jnp.zeros((D,), dtype=jnp.float32)
    w = jax.random.normal(kw, (D, D), dtype=jnp.float32) * 0.02
    b = jax.random.normal(kbias, (D,), dtype=jnp.float32) * 0.02

    out = prenorm_linear(x, gamma, beta, w, b)
    jax.block_until_ready(out)

    ref = _reference(x, gamma, beta, w, b)
    assert out.shape == (B, S, D)
    assert jnp.allclose(out, ref, atol=1e-4, rtol=1e-4), (
        float(jnp.max(jnp.abs(out - ref))))

    print("KERNEL_OK")
</pallas_src>

<mosaic_0001>
module attributes {stable_mosaic.version = 11 : i64} {
  func.func @_prenorm_fused_kernel(%arg0: i32, %arg1: memref<8x128xf32, #tpu.memory_space<vmem>>, %arg2: memref<1x128xf32, #tpu.memory_space<vmem>>, %arg3: memref<1x128xf32, #tpu.memory_space<vmem>>, %arg4: memref<128x128xf32, #tpu.memory_space<vmem>>, %arg5: memref<1x128xf32, #tpu.memory_space<vmem>>, %arg6: memref<8x128xf32, #tpu.memory_space<vmem>>) attributes {dimension_semantics = [#tpu.dimension_semantics<parallel>], iteration_bounds = array<i64: 2>, scalar_prefetch = 0 : i64, scratch_operands = 0 : i64, tpu.core_type = #tpu.core_type<tc>, window_params = [{transform_indices = @transform_0, window_bounds = array<i64: 8, 128>}, {pipeline_mode = #tpu.pipeline_mode<synchronous>, transform_indices = @transform_1, window_bounds = array<i64: 1, 128>}, {pipeline_mode = #tpu.pipeline_mode<synchronous>, transform_indices = @transform_2, window_bounds = array<i64: 1, 128>}, {pipeline_mode = #tpu.pipeline_mode<synchronous>, transform_indices = @transform_3, window_bounds = array<i64: 128, 128>}, {pipeline_mode = #tpu.pipeline_mode<synchronous>, transform_indices = @transform_4, window_bounds = array<i64: 1, 128>}, {transform_indices = @transform_5, window_bounds = array<i64: 8, 128>}]} {
    %c0 = arith.constant 0 : index
    %c0_0 = arith.constant 0 : index
    %0 = vector.load %arg1[%c0, %c0_0] : memref<8x128xf32, #tpu.memory_space<vmem>>, vector<8x128xf32>
    %cst = arith.constant dense<0.000000e+00> : vector<8xf32>
    %1 = vector.multi_reduction <add>, %0, %cst [1] : vector<8x128xf32> to vector<8xf32>
    %2 = vector.shape_cast %1 : vector<8xf32> to vector<8x1xf32>
    %3 = arith.mulf %0, %0 : vector<8x128xf32>
    %cst_1 = arith.constant dense<0.000000e+00> : vector<8xf32>
    %4 = vector.multi_reduction <add>, %3, %cst_1 [1] : vector<8x128xf32> to vector<8xf32>
    %5 = vector.shape_cast %4 : vector<8xf32> to vector<8x1xf32>
    %cst_2 = arith.constant 3.125000e-02 : f32
    %6 = vector.broadcast %cst_2 : f32 to vector<8x1xf32>
    %7 = arith.mulf %2, %6 : vector<8x1xf32>
    %cst_3 = arith.constant 3.125000e-02 : f32
    %8 = vector.broadcast %cst_3 : f32 to vector<8x1xf32>
    %9 = arith.mulf %5, %8 : vector<8x1xf32>
    %10 = arith.mulf %7, %7 : vector<8x1xf32>
    %11 = arith.subf %9, %10 : vector<8x1xf32>
    %cst_4 = arith.constant 0.000000e+00 : f32
    %12 = vector.broadcast %cst_4 : f32 to vector<8x1xf32>
    %13 = arith.maximumf %11, %12 : vector<8x1xf32>
    %cst_5 = arith.constant 9.99999974E-6 : f32
    %14 = vector.broadcast %cst_5 : f32 to vector<8x1xf32>
    %15 = arith.addf %13, %14 : vector<8x1xf32>
    %16 = math.rsqrt %15 : vector<8x1xf32>
    %c0_6 = arith.constant 0 : index
    %c0_7 = arith.constant 0 : index
    %17 = vector.load %arg2[%c0_6, %c0_7] : memref<1x128xf32, #tpu.memory_space<vmem>>, vector<1x128xf32>
    %c0_8 = arith.constant 0 : index
    %c0_9 = arith.constant 0 : index
    %18 = vector.load %arg3[%c0_8, %c0_9] : memref<1x128xf32, #tpu.memory_space<vmem>>, vector<1x128xf32>
    %19 = vector.broadcast %7 : vector<8x1xf32> to vector<8x128xf32>
    %20 = arith.subf %0, %19 : vector<8x128xf32>
    %21 = vector.broadcast %16 : vector<8x1xf32> to vector<8x128xf32>
    %22 = arith.mulf %20, %21 : vector<8x128xf32>
    %23 = vector.broadcast %17 : vector<1x128xf32> to vector<8x128xf32>
    %24 = arith.mulf %22, %23 : vector<8x128xf32>
    %25 = vector.broadcast %18 : vector<1x128xf32> to vector<8x128xf32>
    %26 = arith.addf %24, %25 : vector<8x128xf32>
    %c0_10 = arith.constant 0 : index
    %c0_11 = arith.constant 0 : index
    %27 = vector.load %arg4[%c0_10, %c0_11] : memref<128x128xf32, #tpu.memory_space<vmem>>, vector<128x128xf32>
    %cst_12 = arith.constant dense<0.000000e+00> : vector<8x128xf32>
    %28 = tpu.matmul %26, %27, %cst_12 {dimension_numbers = #tpu.dot_dimension_numbers<[1], [0], [0], [1], [0, 0, 1, 1], [], []>} : vector<8x128xf32>, vector<128x128xf32>, vector<8x128xf32> -> vector<8x128xf32>
    %c0_13 = arith.constant 0 : index
    %c0_14 = arith.constant 0 : index
    %29 = vector.load %arg5[%c0_13, %c0_14] : memref<1x128xf32, #tpu.memory_space<vmem>>, vector<1x128xf32>
    %30 = vector.broadcast %29 : vector<1x128xf32> to vector<8x128xf32>
    %31 = arith.addf %28, %30 : vector<8x128xf32>
    %c0_15 = arith.constant 0 : index
    %c0_16 = arith.constant 0 : index
    %32 = vector.load %arg6[%c0_15, %c0_16] : memref<8x128xf32, #tpu.memory_space<vmem>>, vector<8x128xf32>
    tpu.vector_store %arg6[%c0_15, %c0_16], %31 {strides = array<i32>} : memref<8x128xf32, #tpu.memory_space<vmem>>, vector<8x128xf32>,
    return
  }
  func.func @transform_0(%arg0: i32) -> (i32, i32) {
    %c0_i32 = arith.constant 0 : i32
    %c0_i32_0 = arith.constant 0 : i32
    return %arg0, %c0_i32 : i32, i32
  }
  func.func @transform_1(%arg0: i32) -> (i32, i32) {
    %c0_i32 = arith.constant 0 : i32
    %c0_i32_0 = arith.constant 0 : i32
    %c0_i32_1 = arith.constant 0 : i32
    return %c0_i32, %c0_i32_0 : i32, i32
  }
  func.func @transform_2(%arg0: i32) -> (i32, i32) {
    %c0_i32 = arith.constant 0 : i32
    %c0_i32_0 = arith.constant 0 : i32
    %c0_i32_1 = arith.constant 0 : i32
    return %c0_i32, %c0_i32_0 : i32, i32
  }
  func.func @transform_3(%arg0: i32) -> (i32, i32) {
    %c0_i32 = arith.constant 0 : i32
    %c0_i32_0 = arith.constant 0 : i32
    %c0_i32_1 = arith.constant 0 : i32
    return %c0_i32, %c0_i32_0 : i32, i32
  }
  func.func @transform_4(%arg0: i32) -> (i32, i32) {
    %c0_i32 = arith.constant 0 : i32
    %c0_i32_0 = arith.constant 0 : i32
    %c0_i32_1 = arith.constant 0 : i32
    return %c0_i32, %c0_i32_0 : i32, i32
  }
  func.func @transform_5(%arg0: i32) -> (i32, i32) {
    %c0_i32 = arith.constant 0 : i32
    %c0_i32_0 = arith.constant 0 : i32
    return %arg0, %c0_i32 : i32, i32
  }
}

</mosaic_0001>

<llo_original>
// kernel: prenorm_linear.1
$region0: #{prenorm_linear.1}
  #allocation0 [shape = 'u32[]', space=smem, size = 0x4, offset = 0x4, fixed_abs, tag = 'smem constant byte address 0x4 - core index']
  #allocation1 [shape = 'u32[72,128]{1,0:T(1,128)}', space=vmem, size = 0x9000, scoped, tag = 'internal scratch']
  %s0 = inlined_call_operand.vmem [shape: f32[16,128], index: 0, kind: input, shape index: {}]
  %s1 = inlined_call_operand.vmem [shape: f32[1,128], index: 1, kind: input, shape index: {}]
  %s2 = inlined_call_operand.vmem [shape: f32[1,128], index: 2, kind: input, shape index: {}]
  %s3 = inlined_call_operand.vmem [shape: f32[128,128], index: 3, kind: input, shape index: {}]
  %s4 = inlined_call_operand.vmem [shape: f32[1,128], index: 4, kind: input, shape index: {}]
  %s5 = inlined_call_operand.vmem [shape: f32[16,128], index: 5, kind: output, shape index: {}]
  %s6 = sld [smem:[#allocation0]]
  $region53: #{prenorm_linear.1} parent=0
    _
  %s8 = ssub.s32 1, %s6
  %s9 = scalar_select 0, %s8, %s6
  loop: start=0, step=1, limit=4
  $region2: #{prenorm_linear.1} parent=0 // loop_pre_header
    _
  $region3: #{prenorm_linear.1} parent=0 // loop_header
    %s11 = sphi 0, %s15
    %p12 = scmp.ge.s32.totalorder %s11, 4
    %s21 = sphi 0, %s23
    %s24 = sphi 0, %s21
    %s25 = sphi 0, %s24
    %s41 = sphi 0, %s25
    %s45 = sphi 0, %s45
    %s47 = sphi 0, %s45
    %s48 = sphi 0, %s47
    %s62 = sphi 0, %s48
    %s66 = sphi 0, %s66
    %s68 = sphi 0, %s66
    %s69 = sphi 0, %s68
    %s83 = sphi 0, %s69
    %s87 = sphi 0, %s87
    %s89 = sphi 0, %s87
    %s90 = sphi 0, %s89
    %s104 = sphi 0, %s90
    %s108 = sphi 0, %s108
    %s110 = sphi 0, %s108
    %s111 = sphi 0, %s110
    %s125 = sphi 0, %s111
    %s131 = sphi 0, %s133
    %s134 = sphi 0, %s131
    %s135 = sphi 0, %s134
    %s151 = sphi 0, %s135
  $region4: #{prenorm_linear.1} parent=0 // loop_header_branch
    %14 = sbr.rel (%p12) target = $region8
  $region5: #{prenorm_linear.1} parent=0 // loop_body
    %s16 = ssub.s32 %s11, 1
    %s17 = ssub.s32 %s11, 2
    %s18 = sadd.s32 %s11, 1
    %s19 = ssub.s32 %s11, %s18
    %p20 = scmp.eq.s32.totalorder %s19, 0
    %s22 = sadd.s32 %s21, 1
    %s23 = scalar_select %p20, %s21, %s22
    %p26 = pneg %p20
    %p27 = scmp.eq.s32.totalorder %s11, 1
    %p28 = por %p26, %p27
    %p29 = scmp.ne.s32.totalorder %s21, %s24
    %p30 = scmp.eq.s32.totalorder %s11, 0
    %p31 = por %p29, %p30
    %p32 = scmp.ne.s32.totalorder %s21, %s24
    %p33 = scmp.eq.s32.totalorder %s16, 1
    %p34 = por %p32, %p33
    %p35 = scmp.ne.s32.totalorder %s24, %s25
    %p36 = scmp.eq.s32.totalorder %s16, 0
    %p37 = por %p35, %p36
    %p38 = scmp.ne.s32.totalorder %s24, %s25
    %p39 = scmp.eq.s32.totalorder %s17, 1
    %p40 = por %p38, %p39
    %p42 = scmp.ne.s32.totalorder %s25, %s41
    %p43 = scmp.eq.s32.totalorder %s17, 0
    %p44 = por %p42, %p43
    %s46 = sadd.s32 %s45, 1
    %p49 = scmp.eq.s32.totalorder %s11, 1
    %p50 = scmp.ne.s32.totalorder %s45, %s47
    %p51 = scmp.eq.s32.totalorder %s11, 0
    %p52 = por %p50, %p51
    %p53 = scmp.ne.s32.totalorder %s45, %s47
    %p54 = scmp.eq.s32.totalorder %s16, 1
    %p55 = por %p53, %p54
    %p56 = scmp.ne.s32.totalorder %s47, %s48
    %p57 = scmp.eq.s32.totalorder %s16, 0
    %p58 = por %p56, %p57
    %p59 = scmp.ne.s32.totalorder %s47, %s48
    %p60 = scmp.eq.s32.totalorder %s17, 1
    %p61 = por %p59, %p60
    %p63 = scmp.ne.s32.totalorder %s48, %s62
    %p64 = scmp.eq.s32.totalorder %s17, 0
    %p65 = por %p63, %p64
    %s67 = sadd.s32 %s66, 1
    %p70 = scmp.eq.s32.totalorder %s11, 1
    %p71 = scmp.ne.s32.totalorder %s66, %s68
    %p72 = scmp.eq.s32.totalorder %s11, 0
    %p73 = por %p71, %p72
    %p74 = scmp.ne.s32.totalorder %s66, %s68
    %p75 = scmp.eq.s32.totalorder %s16, 1
    %p76 = por %p74, %p75
    %p77 = scmp.ne.s32.totalorder %s68, %s69
    %p78 = scmp.eq.s32.totalorder %s16, 0
    %p79 = por %p77, %p78
    %p80 = scmp.ne.s32.totalorder %s68, %s69
    %p81 = scmp.eq.s32.totalorder %s17, 1
    %p82 = por %p80, %p81
    %p84 = scmp.ne.s32.totalorder %s69, %s83
    %p85 = scmp.eq.s32.totalorder %s17, 0
    %p86 = por %p84, %p85
    %s88 = sadd.s32 %s87, 1
    %p91 = scmp.eq.s32.totalorder %s11, 1
    %p92 = scmp.ne.s32.totalorder %s87, %s89
    %p93 = scmp.eq.s32.totalorder %s11, 0
    %p94 = por %p92, %p93
    %p95 = scmp.ne.s32.totalorder %s87, %s89
    %p96 = scmp.eq.s32.totalorder %s16, 1
    %p97 = por %p95, %p96
    %p98 = scmp.ne.s32.totalorder %s89, %s90
    %p99 = scmp.eq.s32.totalorder %s16, 0
    %p100 = por %p98, %p99
    %p101 = scmp.ne.s32.totalorder %s89, %s90
    %p102 = scmp.eq.s32.totalorder %s17, 1
    %p103 = por %p101, %p102
    %p105 = scmp.ne.s32.totalorder %s90, %s104
    %p106 = scmp.eq.s32.totalorder %s17, 0
    %p107 = por %p105, %p106
    %s109 = sadd.s32 %s108, 1
    %p112 = scmp.eq.s32.totalorder %s11, 1
    %p113 = scmp.ne.s32.totalorder %s108, %s110
    %p114 = scmp.eq.s32.totalorder %s11, 0
    %p115 = por %p113, %p114
    %p116 = scmp.ne.s32.totalorder %s108, %s110
    %p117 = scmp.eq.s32.totalorder %s16, 1
    %p118 = por %p116, %p117
    %p119 = scmp.ne.s32.totalorder %s110, %s111
    %p120 = scmp.eq.s32.totalorder %s16, 0
    %p121 = por %p119, %p120
    %p122 = scmp.ne.s32.totalorder %s110, %s111
    %p123 = scmp.eq.s32.totalorder %s17, 1
    %p124 = por %p122, %p123
    %p126 = scmp.ne.s32.totalorder %s111, %s125
    %p127 = scmp.eq.s32.totalorder %s17, 0
    %p128 = por %p126, %p127
    %s129 = ssub.s32 %s11, %s18
    %p130 = scmp.eq.s32.totalorder %s129, 0
    %s132 = sadd.s32 %s131, 1
    %s133 = scalar_select %p130, %s131, %s132
    %p136 = pneg %p130
    %p137 = scmp.eq.s32.totalorder %s11, 1
    %p138 = por %p136, %p137
    %p139 = scmp.ne.s32.totalorder %s131, %s134
    %p140 = scmp.eq.s32.totalorder %s11, 0
    %p141 = por %p139, %p140
    %p142 = scmp.ne.s32.totalorder %s131, %s134
    %p143 = scmp.eq.s32.totalorder %s16, 1
    %p144 = por %p142, %p143
    %p145 = scmp.ne.s32.totalorder %s134, %s135
    %p146 = scmp.eq.s32.totalorder %s16, 0
    %p147 = por %p145, %p146
    %p148 = scmp.ne.s32.totalorder %s134, %s135
    %p149 = scmp.eq.s32.totalorder %s17, 1
    %p150 = por %p148, %p149
    %p152 = scmp.ne.s32.totalorder %s135, %s151
    %p153 = scmp.eq.s32.totalorder %s17, 0
    %p154 = por %p152, %p153
    %p155 = scmp.le.s32.totalorder 1, %s11
    %p156 = scmp.lt.s32.totalorder %s11, 3
    %p157 = pnand %p155, %p156
    %p158 = pneg %p157
    // Predicated region
    $region9: #{prenorm_linear.1} parent=5 // pred_check
      _
    $region10: #{prenorm_linear.1} parent=5 // pred_check_branch
      %160 = sbr.rel (%p157) target = $region12
    $region11: #{prenorm_linear.1} parent=5 // pred_region
      %s161 = ssub.s32 %s11, 1
      // Predicated region
      $region13: #{prenorm_linear.1} parent=11 // pred_check
        %p162 = pneg %p58
      $region14: #{prenorm_linear.1} parent=11 // pred_check_branch
        %164 = sbr.rel (%p162) target = $region16
      $region15: #{prenorm_linear.1} parent=11 // pred_region
        _
      $region16: #{prenorm_linear.1} parent=11 // pred_fallthru
        _
      // Predicated region
      $region17: #{prenorm_linear.1} parent=11 // pred_check
        %p165 = pneg %p79
      $region18: #{prenorm_linear.1} parent=11 // pred_check_branch
        %167 = sbr.rel (%p165) target = $region20
      $region19: #{prenorm_linear.1} parent=11 // pred_region
        _
      $region20: #{prenorm_linear.1} parent=11 // pred_fallthru
        _
      // Predicated region
      $region21: #{prenorm_linear.1} parent=11 // pred_check
        %p168 = pneg %p100
      $region22: #{prenorm_linear.1} parent=11 // pred_check_branch
        %170 = sbr.rel (%p168) target = $region24
      $region23: #{prenorm_linear.1} parent=11 // pred_region
        _
      $region24: #{prenorm_linear.1} parent=11 // pred_fallthru
        _
      // Predicated region
      $region25: #{prenorm_linear.1} parent=11 // pred_check
        %p171 = pneg %p121
      $region26: #{prenorm_linear.1} parent=11 // pred_check_branch
        %173 = sbr.rel (%p171) target = $region28
      $region27: #{prenorm_linear.1} parent=11 // pred_region
        _
      $region28: #{prenorm_linear.1} parent=11 // pred_fallthru
        _
    $region12: #{prenorm_linear.1} parent=5 // pred_fallthru
      _
    %p174 = scmp.lt.s32.totalorder %s11, 2
    // Predicated region
    $region29: #{prenorm_linear.1} parent=5 // pred_check
      %p175 = pneg %p174
    $region30: #{prenorm_linear.1} parent=5 // pred_check_branch
      %177 = sbr.rel (%p175) target = $region32
    $region31: #{prenorm_linear.1} parent=5 // pred_region
      // Predicated region
      $region33: #{prenorm_linear.1} parent=31 // pred_check
        %p178 = pneg %p31
      $region34: #{prenorm_linear.1} parent=31 // pred_check_branch
        %180 = sbr.rel (%p178) target = $region36
      $region35: #{prenorm_linear.1} parent=31 // pred_region
        %p181 = scmp.lt.s32.totalorder %s11, 1
        %s182 = scalar_select %p181, %s11, 1
        %s183 = smul.addr %s182, 8
        %s184 = scalar_lea.vmem %s0, %s183
      $region36: #{prenorm_linear.1} parent=31 // pred_fallthru
        _
    $region32: #{prenorm_linear.1} parent=5 // pred_fallthru
      _
    %p185 = scmp.le.s32.totalorder 1, %s11
    %p186 = scmp.lt.s32.totalorder %s11, 3
    %p187 = pnand %p185, %p186
    %p188 = pneg %p187
    // Predicated region
    $region37: #{prenorm_linear.1} parent=5 // pred_check
      _
    $region38: #{prenorm_linear.1} parent=5 // pred_check_branch
      %190 = sbr.rel (%p187) target = $region40
    $region39: #{prenorm_linear.1} parent=5 // pred_region
      %s191 = ssub.s32 %s11, 1
      %p192 = scmp.lt.s32.totalorder %s16, 1
      %s193 = scalar_select %p192, %s16, 1
      %s194 = smul.addr %s193, 8
      %s195 = scalar_lea.vmem %s0, %s194
      %p196 = pneg %p37
      %p197 = pneg %p34
      %p198 = pneg %p58
      %p199 = pneg %p55
      %p200 = pneg %p79
      %p201 = pneg %p76
      %p202 = pneg %p100
      %p203 = pneg %p97
      %p204 = pneg %p121
      %p205 = pneg %p118
      %p206 = pneg %p147
      %p207 = pneg %p144
      %p208 = scmp.lt.s32.totalorder %s16, 1
      %s209 = scalar_select %p208, %s16, 1
      %s210 = smul.addr %s209, 8
      %s211 = scalar_lea.vmem %s5, %s210
      %p212 = scmp.lt.s32.totalorder %s16, 1
      %s213 = scalar_select %p212, %s16, 1
      %s214 = smul.addr %s213, 8
      %s215 = scalar_lea.vmem %s0, %s214
      %p216 = scmp.lt.s32.totalorder %s16, 1
      %s217 = scalar_select %p216, %s16, 1
      %s218 = smul.addr %s217, 8
      %s219 = scalar_lea.vmem %s5, %s218
      %v220 = vld [vmem:[%s215] sm:$0xff]
      %221 = vadd.xlane.f32.xlu0 %v220
      %v222 = vpop.xlane.xlu0 %221
      %v223 = vmul.f32 %v220, %v220
      %224 = vadd.xlane.f32.xlu0 %v223
      %v225 = vpop.xlane.xlu0 %224
      %v226 = vmul.f32 %v222, 0.03125
      %v227 = vmul.f32 %v225, 0.03125
      %v228 = vmul.f32 %v226, %v226
      %v229 = vsub.f32 %v227, %v228
      %v230 = vmax.f32 %v229, 0.0
      %v231 = vadd.f32 %v230, 1e-05
      %v232 = vrsqrt.pop %v231
      %v233 = vmul.f32 %v232, %v231
      %v234 = vmul.f32 %v233, %v232
      %v235 = vmul.f32 0.5, %v234
      %v236 = vsub.f32 1.5, %v235
      %v237 = vmul.f32 %v232, %v236
      %vm238 = vweird.f32 %v231
      %vm239 = vweird.f32 %v232
      %vm240 = vmor %vm238, %vm239
      %v241 = vsel %vm240, %v232, %v237
      %v242 = vld [vmem:[%s1] sm:$0x1]
      %v243 = vld [vmem:[%s2] sm:$0x1]
      %v244 = vsub.f32 %v220, %v226
      %v245 = vmul.f32 %v244, %v241
      %v247 = vperm.slane %v242, 0
      %v249 = vmul.f32 %v245, %v247
      %v251 = vperm.slane %v243, 0
      %v253 = vadd.f32 %v249, %v251
      %v254 = vld [vmem:[%s3] sm:$0xff]
      %v255 = vld [vmem:[%s3 + $0x8] sm:$0xff]
      %v256 = vld [vmem:[%s3 + $0x10] sm:$0xff]
      %v257 = vld [vmem:[%s3 + $0x18] sm:$0xff]
      %v258 = vld [vmem:[%s3 + $0x20] sm:$0xff]
      %v259 = vld [vmem:[%s3 + $0x28] sm:$0xff]
      %v260 = vld [vmem:[%s3 + $0x30] sm:$0xff]
      %v261 = vld [vmem:[%s3 + $0x38] sm:$0xff]
      %v262 = vld [vmem:[%s3 + $0x40] sm:$0xff]
      %v263 = vld [vmem:[%s3 + $0x48] sm:$0xff]
      %v264 = vld [vmem:[%s3 + $0x50] sm:$0xff]
      %v265 = vld [vmem:[%s3 + $0x58] sm:$0xff]
      %v266 = vld [vmem:[%s3 + $0x60] sm:$0xff]
      %v267 = vld [vmem:[%s3 + $0x68] sm:$0xff]
      %v268 = vld [vmem:[%s3 + $0x70] sm:$0xff]
      %v269 = vld [vmem:[%s3 + $0x78] sm:$0xff]
      %v270 = vld [vmem:[%s4] sm:$0x1]
      %v272 = vperm.slane %v270, 0
      %274 = vmatpush.msra.mxu0 %v269
      %275 = vmatpush.msra.mxu0 %v268
      %276 = vmatpush.msra.mxu0 %v267
      %277 = vmatpush.msra.mxu0 %v266
      %278 = vmatpush.msra.mxu0 %v265
      %279 = vmatpush.msra.mxu0 %v264
      %280 = vmatpush.msra.mxu0 %v263
      %281 = vmatpush.msra.mxu0 %v262
      %282 = vmatpush.msra.mxu0 %v261
      %283 = vmatpush.msra.mxu0 %v260
      %284 = vmatpush.msra.mxu0 %v259
      %285 = vmatpush.msra.mxu0 %v258
      %286 = vmatpush.msra.mxu0 %v257
      %287 = vmatpush.msra.mxu0 %v256
      %288 = vmatpush.msra.mxu0 %v255
      %289 = vmatpush.msra.mxu0 %v254
      %290 = vmatmul.f32.gmra.mxu0 %v253
      %v291 = vpop.f32.mrf.mxu0
      %v292 = vadd.f32 %v272, %v291
      %293 = vdwg.mxu0
      %294 = vst [vmem:[%s219] sm:$0xff] %v292
      %p295 = scmp.lt.s32.totalorder %s16, 1
      %s296 = scalar_select %p295, %s16, 1
      %s297 = smul.addr %s296, 8
      %s298 = scalar_lea.vmem %s5, %s297
      // Predicated region
      $region41: #{prenorm_linear.1} parent=39 // pred_check
        %p299 = pneg %p144
      $region42: #{prenorm_linear.1} parent=39 // pred_check_branch
        %301 = sbr.rel (%p299) target = $region44
      $region43: #{prenorm_linear.1} parent=39 // pred_region
        _
      $region44: #{prenorm_linear.1} parent=39 // pred_fallthru
        _
    $region40: #{prenorm_linear.1} parent=5 // pred_fallthru
      _
    %p302 = scmp.le.s32.totalorder 2, %s11
    // Predicated region
    $region45: #{prenorm_linear.1} parent=5 // pred_check
      %p303 = pneg %p302
    $region46: #{prenorm_linear.1} parent=5 // pred_check_branch
      %305 = sbr.rel (%p303) target = $region48
    $region47: #{prenorm_linear.1} parent=5 // pred_region
      %s306 = ssub.s32 %s11, 2
      // Predicated region
      $region49: #{prenorm_linear.1} parent=47 // pred_check
        %p307 = pneg %p150
      $region50: #{prenorm_linear.1} parent=47 // pred_check_branch
        %309 = sbr.rel (%p307) target = $region52
      $region51: #{prenorm_linear.1} parent=47 // pred_region
        %p310 = scmp.lt.s32.totalorder %s17, 1
        %s311 = scalar_select %p310, %s17, 1
        %s312 = smul.addr %s311, 8
        %s313 = scalar_lea.vmem %s5, %s312
      $region52: #{prenorm_linear.1} parent=47 // pred_fallthru
        _
    $region48: #{prenorm_linear.1} parent=5 // pred_fallthru
      _
  $region6: #{prenorm_linear.1} parent=0 // loop_footer
    %s15 = sadd.s32 1, %s11
  $region7: #{prenorm_linear.1} parent=0 // loop_footer_branch
    %10 = sbr.rel target = $region3
  $region8: #{prenorm_linear.1} parent=0 // loop_exit
    _

</llo_original>
